<compile_context>
chip_gen: v6e
topology: v6e:2x2x1
jax: 0.10.0
libtpu: 0.0.40
codegen_flags: <defaults>
</compile_context>

<pallas_src>
import functools

import numpy as np
import jax
import jax.numpy as jnp
from jax.experimental import pallas as pl
from jax.experimental.pallas import tpu as pltpu

_LANES = 128
_SUBLANES = 8


# -----------------------------------------------------------------------------
# Pallas kernel
# -----------------------------------------------------------------------------
def _fourier_kernel(x_ref, o_ref, *, freqs, use_double_angle):
    """x_ref: (Bb, R, 128) input tile; o_ref: (Bb, 2F, R, 128) output tile.

    Output slab f (0 <= f < F) holds sin(freqs[f] * x); slab F + f holds
    cos(freqs[f] * x).  Slabs are written directly as they are computed.
    """
    F = len(freqs)
    x = x_ref[...].astype(jnp.float32)            # (Bb, R, 128), sublane+lane dense
    odt = o_ref.dtype

    if use_double_angle:
        # step == 1  =>  freqs[k+1] = 2 * freqs[k]: one EUP sin/cos pair, the rest
        # are cheap VPU double-angle updates.
        a = freqs[0] * x
        s = jnp.sin(a)
        c = jnp.cos(a)
        o_ref[:, 0, :, :] = s.astype(odt)
        o_ref[:, F, :, :] = c.astype(odt)
        for k in range(1, F):
            s, c = 2.0 * s * c, 1.0 - 2.0 * s * s
            o_ref[:, k, :, :] = s.astype(odt)
            o_ref[:, F + k, :, :] = c.astype(odt)
    else:
        for k, f in enumerate(freqs):
            a = f * x
            o_ref[:, k, :, :] = jnp.sin(a).astype(odt)
            o_ref[:, F + k, :, :] = jnp.cos(a).astype(odt)


# -----------------------------------------------------------------------------
# Block-size heuristics
# -----------------------------------------------------------------------------
def _largest_divisor_leq(n, cap):
    cap = max(1, min(cap, n))
    for d in range(cap, 0, -1):
        if n % d == 0:
            return d
    return 1


def _choose_row_block(r_total, row_cap):
    """Largest multiple-of-8 divisor of r_total that is <= row_cap.

    r_total is always a multiple of 8 (we pad M to a multiple of 8*128), so this
    always succeeds -- no risky 'use the whole axis' fallback.
    """
    cap = max(_SUBLANES, min(row_cap, r_total))
    start = cap - cap % _SUBLANES
    for r in range(start, 0, -_SUBLANES):
        if r_total % r == 0:
            return r
    return _SUBLANES


# -----------------------------------------------------------------------------
# Wrapper
# -----------------------------------------------------------------------------
def fourier_features(x, first=5.0, last=6.0, step=1.0, out_dtype=None):
    """Pallas implementation of FourierFeatures.forward.

    x: (B, C, *spatial) with >= 2 dims.  Returns (B, 2*F*C, *spatial).
    """
    assert x.ndim >= 2, "FourierFeatures expects at least 2 dims"
    out_dtype = x.dtype if out_dtype is None else out_dtype

    # Same inclusive-endpoint rule as torch.arange(first, last + 1e-08, step).
    exps = np.arange(first, last + 1e-8, step, dtype=np.float64)
    freqs = tuple(float((2.0 ** e) * 2.0 * np.pi) for e in exps)
    F = len(freqs)
    use_double_angle = F > 1 and abs(float(step) - 1.0) < 1e-12

    B = x.shape[0]
    C = x.shape[1]
    spatial = x.shape[2:]
    M = int(np.prod(x.shape[1:]))                  # C * prod(spatial)

    # Lane+sublane dense layout: flatten non-batch dims and pad to a multiple of
    # 8*128 so every (R, 128) block is (8,128)-aligned.
    tile_elems = _SUBLANES * _LANES
    m_pad = -(-M // tile_elems) * tile_elems
    x2 = x.reshape(B, M)
    if m_pad != M:
        x2 = jnp.pad(x2, ((0, 0), (0, m_pad - M)))
    r_total = m_pad // _LANES                      # multiple of 8
    x3 = x2.reshape(B, r_total, _LANES)

    # ~4 MiB of output per grid step: each step amortizes the per-step pipeline
    # overhead, while double-buffered in+out blocks stay ~10 MiB for F=2 (fits the
    # 32 MiB scoped VMEM default on v5e/v6e/v7x).
    out_bytes_per_row = 2 * F * _LANES * jnp.dtype(out_dtype).itemsize
    row_cap = max(_SUBLANES, (4 * 1024 * 1024) // out_bytes_per_row)
    r_blk = _choose_row_block(r_total, row_cap)

    # If a whole batch row fits in one block, merge several batch rows per step --
    # but keep >= 2 grid programs when B > 1 so both v7x TensorCores get work.
    if r_blk == r_total and B > 1:
        desired = min(max(1, row_cap // r_total), max(1, B // 2))
        b_blk = _largest_divisor_leq(B, desired)
    else:
        b_blk = 1

    grid = (B // b_blk, r_total // r_blk)
    kern = functools.partial(_fourier_kernel, freqs=freqs,
                             use_double_angle=use_double_angle)

    out = pl.pallas_call(
        kern,
        out_shape=jax.ShapeDtypeStruct((B, 2 * F, r_total, _LANES), out_dtype),
        grid=grid,
        in_specs=[pl.BlockSpec((b_blk, r_blk, _LANES), lambda b, j: (b, j, 0))],
        out_specs=pl.BlockSpec((b_blk, 2 * F, r_blk, _LANES),
                               lambda b, j: (b, 0, j, 0)),
        compiler_params=pltpu.CompilerParams(
            dimension_semantics=("parallel", "parallel")),
    )(x3)

    # (B, 2F, R_total, 128) -> (B, 2F, M_pad) [-> drop pad] -> (B, 2F*C, *spatial).
    out = out.reshape(B, 2 * F, m_pad)
    if m_pad != M:
        out = out[:, :, :M]
    return out.reshape((B, 2 * F * C) + spatial)


# -----------------------------------------------------------------------------
# Pure-JAX reference (mirrors the PyTorch module) for validation
# -----------------------------------------------------------------------------
def ref_fourier_features(x, first=5.0, last=6.0, step=1.0):
    exps = np.arange(first, last + 1e-8, step, dtype=np.float64)
    freqs = jnp.asarray((2.0 ** exps) * 2.0 * np.pi, dtype=x.dtype)       # (F,)
    freqs = freqs.reshape((-1,) + (1,) * (x.ndim - 1))                    # (F,1,...,1)
    features = freqs * x[:, None]                                         # (B,F,C,*sp)
    features = features.reshape((x.shape[0], -1) + x.shape[2:])           # (B,F*C,*sp)
    return jnp.concatenate([jnp.sin(features), jnp.cos(features)], axis=1)


# -----------------------------------------------------------------------------
# Main
# -----------------------------------------------------------------------------
if __name__ == "__main__":
    B, C, H, W = 2, 4, 16, 16

    key = jax.random.PRNGKey(0)
    x = jax.random.normal(key, (B, C, H, W), jnp.float32)                 # NCHW input

    out = jax.block_until_ready(fourier_features(x))
    ref = ref_fourier_features(x)

    F = 2                                                                 # arange(5, 6+eps) -> [5, 6]
    assert out.shape == (B, 2 * F * C, H, W), out.shape
    err = float(jnp.max(jnp.abs(out - ref)))
    assert err < 1e-2, f"max abs error {err}"
    print("KERNEL_OK")
</pallas_src>

<mosaic_0001>
module attributes {stable_mosaic.version = 11 : i64} {
  func.func @_fourier_kernel(%arg0: i32, %arg1: i32, %arg2: memref<1x8x128xf32, #tpu.memory_space<vmem>>, %arg3: memref<1x4x8x128xf32, #tpu.memory_space<vmem>>) attributes {dimension_semantics = [#tpu.dimension_semantics<parallel>, #tpu.dimension_semantics<parallel>], iteration_bounds = array<i64: 2, 1>, scalar_prefetch = 0 : i64, scratch_operands = 0 : i64, tpu.core_type = #tpu.core_type<tc>, window_params = [{transform_indices = @transform_0, window_bounds = array<i64: 1, 8, 128>}, {transform_indices = @transform_1, window_bounds = array<i64: 1, 4, 8, 128>}]} {
    %c0 = arith.constant 0 : index
    %c0_0 = arith.constant 0 : index
    %c0_1 = arith.constant 0 : index
    %0 = vector.load %arg2[%c0, %c0_0, %c0_1] : memref<1x8x128xf32, #tpu.memory_space<vmem>>, vector<1x8x128xf32>
    %cst = arith.constant 201.061935 : f32
    %1 = vector.broadcast %cst : f32 to vector<1x8x128xf32>
    %2 = arith.mulf %1, %0 : vector<1x8x128xf32>
    %3 = math.sin %2 : vector<1x8x128xf32>
    %4 = math.cos %2 : vector<1x8x128xf32>
    %c0_2 = arith.constant 0 : index
    %c0_3 = arith.constant 0 : index
    %c0_4 = arith.constant 0 : index
    %c0_5 = arith.constant 0 : index
    %5 = vector.load %arg3[%c0_2, %c0_3, %c0_4, %c0_5] : memref<1x4x8x128xf32, #tpu.memory_space<vmem>>, vector<1x1x8x128xf32>
    %6 = vector.shape_cast %5 : vector<1x1x8x128xf32> to vector<1x8x128xf32>
    %7 = vector.shape_cast %3 : vector<1x8x128xf32> to vector<1x1x8x128xf32>
    tpu.vector_store %arg3[%c0_2, %c0_3, %c0_4, %c0_5], %7 {strides = array<i32>} : memref<1x4x8x128xf32, #tpu.memory_space<vmem>>, vector<1x1x8x128xf32>,
    %c0_6 = arith.constant 0 : index
    %c2 = arith.constant 2 : index
    %c0_7 = arith.constant 0 : index
    %c0_8 = arith.constant 0 : index
    %8 = vector.load %arg3[%c0_6, %c2, %c0_7, %c0_8] : memref<1x4x8x128xf32, #tpu.memory_space<vmem>>, vector<1x1x8x128xf32>
    %9 = vector.shape_cast %8 : vector<1x1x8x128xf32> to vector<1x8x128xf32>
    %10 = vector.shape_cast %4 : vector<1x8x128xf32> to vector<1x1x8x128xf32>
    tpu.vector_store %arg3[%c0_6, %c2, %c0_7, %c0_8], %10 {strides = array<i32>} : memref<1x4x8x128xf32, #tpu.memory_space<vmem>>, vector<1x1x8x128xf32>,
    %cst_9 = arith.constant 2.000000e+00 : f32
    %11 = vector.broadcast %cst_9 : f32 to vector<1x8x128xf32>
    %12 = arith.mulf %11, %3 : vector<1x8x128xf32>
    %13 = arith.mulf %12, %4 : vector<1x8x128xf32>
    %cst_10 = arith.constant 2.000000e+00 : f32
    %14 = vector.broadcast %cst_10 : f32 to vector<1x8x128xf32>
    %15 = arith.mulf %14, %3 : vector<1x8x128xf32>
    %16 = arith.mulf %15, %3 : vector<1x8x128xf32>
    %cst_11 = arith.constant 1.000000e+00 : f32
    %17 = vector.broadcast %cst_11 : f32 to vector<1x8x128xf32>
    %18 = arith.subf %17, %16 : vector<1x8x128xf32>
    %c0_12 = arith.constant 0 : index
    %c1 = arith.constant 1 : index
    %c0_13 = arith.constant 0 : index
    %c0_14 = arith.constant 0 : index
    %19 = vector.load %arg3[%c0_12, %c1, %c0_13, %c0_14] : memref<1x4x8x128xf32, #tpu.memory_space<vmem>>, vector<1x1x8x128xf32>
    %20 = vector.shape_cast %19 : vector<1x1x8x128xf32> to vector<1x8x128xf32>
    %21 = vector.shape_cast %13 : vector<1x8x128xf32> to vector<1x1x8x128xf32>
    tpu.vector_store %arg3[%c0_12, %c1, %c0_13, %c0_14], %21 {strides = array<i32>} : memref<1x4x8x128xf32, #tpu.memory_space<vmem>>, vector<1x1x8x128xf32>,
    %c0_15 = arith.constant 0 : index
    %c3 = arith.constant 3 : index
    %c0_16 = arith.constant 0 : index
    %c0_17 = arith.constant 0 : index
    %22 = vector.load %arg3[%c0_15, %c3, %c0_16, %c0_17] : memref<1x4x8x128xf32, #tpu.memory_space<vmem>>, vector<1x1x8x128xf32>
    %23 = vector.shape_cast %22 : vector<1x1x8x128xf32> to vector<1x8x128xf32>
    %24 = vector.shape_cast %18 : vector<1x8x128xf32> to vector<1x1x8x128xf32>
    tpu.vector_store %arg3[%c0_15, %c3, %c0_16, %c0_17], %24 {strides = array<i32>} : memref<1x4x8x128xf32, #tpu.memory_space<vmem>>, vector<1x1x8x128xf32>,
    return
  }
  func.func @transform_0(%arg0: i32, %arg1: i32) -> (i32, i32, i32) {
    %c0_i32 = arith.constant 0 : i32
    %c0_i32_0 = arith.constant 0 : i32
    return %arg0, %arg1, %c0_i32 : i32, i32, i32
  }
  func.func @transform_1(%arg0: i32, %arg1: i32) -> (i32, i32, i32, i32) {
    %c0_i32 = arith.constant 0 : i32
    %c0_i32_0 = arith.constant 0 : i32
    %c0_i32_1 = arith.constant 0 : i32
    return %arg0, %c0_i32, %arg1, %c0_i32_0 : i32, i32, i32, i32
  }
}

</mosaic_0001>

<llo_original>
// kernel: tpu_custom_call.1
$region0: #{tpu_custom_call.1}
  #allocation0 [shape = 'u32[]', space=smem, size = 0x4, offset = 0x4, fixed_abs, tag = 'smem constant byte address 0x4 - core index']
  #allocation1 [shape = 'u32[144,128]{1,0:T(1,128)}', space=vmem, size = 0x12000, scoped, tag = 'internal scratch']
  %s0 = inlined_call_operand.hbm [shape: f32[2,8,128], index: 0, kind: input, shape index: {}]
  %s1 = inlined_call_operand.hbm [shape: f32[2,4,8,128], index: 1, kind: output, shape index: {}]
  %s2 = sld [smem:[#allocation0]]
  $region41: #{tpu_custom_call.1} parent=0
    _
  %s4 = ssub.s32 1, %s2
  %s5 = scalar_select 0, %s4, %s2
  $region1: #{tpu_custom_call.1} parent=0
    #allocation2 [shape = 'u8[8192]{0}', space=vmem, size = 0x2000, scoped, tag = 'input window, operand 0']
    #allocation3 [shape = 's32[2]{0}', space=sflag, size = 0x8, scoped, tag = 'scoped memory for tpu_custom_call.1']
    #allocation4 [shape = 's32[2]{0}', space=sflag, size = 0x8, scoped, tag = 'scoped memory for tpu_custom_call.1']
    #allocation5 [shape = 'u8[32768]{0}', space=vmem, size = 0x8000, scoped, tag = 'output window, operand 0']
    %6 = vsyncpa [#allocation3], 0
    %s7 = scalar_lea.sflag [#allocation3], 1
    %8 = vsyncpa %s7, 0
    %9 = vsyncpa [#allocation4], 0
    %s10 = scalar_lea.sflag [#allocation4], 1
    %11 = vsyncpa %s10, 0
    loop: start=0, step=1, limit=4
    $region2: #{tpu_custom_call.1} parent=1 // loop_pre_header
      _
    $region3: #{tpu_custom_call.1} parent=1 // loop_header
      %s13 = sphi 0, %s17
      %p14 = scmp.ge.s32.totalorder %s13, 4
      %s20 = sphi 0, %s32
      %s21 = sphi 0, %s28
      %s22 = sphi 0, %s20
      %s23 = sphi 0, %s21
      %s24 = sphi 0, %s22
      %s25 = sphi 0, %s23
      %s37 = sphi 0, %s39
      %s40 = sphi 0, %s37
      %s41 = sphi 0, %s40
      %s57 = sphi 0, %s41
      %s65 = sphi 0, %s67
      %s68 = sphi 0, %s65
      %s69 = sphi 0, %s68
      %s85 = sphi 0, %s69
    $region4: #{tpu_custom_call.1} parent=1 // loop_header_branch
      %16 = sbr.rel (%p14) target = $region8
    $region5: #{tpu_custom_call.1} parent=1 // loop_body
      %s18 = ssub.s32 %s13, 1
      %s19 = ssub.s32 %s13, 2
      %s26 = sadd.s32 1, %s21
      %p27 = scmp.ge.s32.totalorder %s26, 1
      %s28 = scalar_select %p27, 0, %s26
      %s29 = sadd.s32 1, %s20
      %s30 = scalar_select %p27, %s29, %s20
      %p31 = scmp.ge.s32.totalorder %s30, 2
      %s32 = scalar_select %p31, 0, %s30
      %s33 = ssub.s32 %s20, %s32
      %s34 = ssub.s32 %s21, %s28
      %s35 = sor.u32 %s33, %s34
      %p36 = scmp.eq.s32.totalorder %s35, 0
      %s38 = sadd.s32 %s37, 1
      %s39 = scalar_select %p36, %s37, %s38
      %p42 = pneg %p36
      %p43 = scmp.eq.s32.totalorder %s13, 1
      %p44 = por %p42, %p43
      %p45 = scmp.ne.s32.totalorder %s37, %s40
      %p46 = scmp.eq.s32.totalorder %s13, 0
      %p47 = por %p45, %p46
      %p48 = scmp.ne.s32.totalorder %s37, %s40
      %p49 = scmp.eq.s32.totalorder %s18, 1
      %p50 = por %p48, %p49
      %p51 = scmp.ne.s32.totalorder %s40, %s41
      %p52 = scmp.eq.s32.totalorder %s18, 0
      %p53 = por %p51, %p52
      %p54 = scmp.ne.s32.totalorder %s40, %s41
      %p55 = scmp.eq.s32.totalorder %s19, 1
      %p56 = por %p54, %p55
      %p58 = scmp.ne.s32.totalorder %s41, %s57
      %p59 = scmp.eq.s32.totalorder %s19, 0
      %p60 = por %p58, %p59
      %s61 = ssub.s32 %s20, %s32
      %s62 = ssub.s32 %s21, %s28
      %s63 = sor.u32 %s61, %s62
      %p64 = scmp.eq.s32.totalorder %s63, 0
      %s66 = sadd.s32 %s65, 1
      %s67 = scalar_select %p64, %s65, %s66
      %p70 = pneg %p64
      %p71 = scmp.eq.s32.totalorder %s13, 1
      %p72 = por %p70, %p71
      %p73 = scmp.ne.s32.totalorder %s65, %s68
      %p74 = scmp.eq.s32.totalorder %s13, 0
      %p75 = por %p73, %p74
      %p76 = scmp.ne.s32.totalorder %s65, %s68
      %p77 = scmp.eq.s32.totalorder %s18, 1
      %p78 = por %p76, %p77
      %p79 = scmp.ne.s32.totalorder %s68, %s69
      %p80 = scmp.eq.s32.totalorder %s18, 0
      %p81 = por %p79, %p80
      %p82 = scmp.ne.s32.totalorder %s68, %s69
      %p83 = scmp.eq.s32.totalorder %s19, 1
      %p84 = por %p82, %p83
      %p86 = scmp.ne.s32.totalorder %s69, %s85
      %p87 = scmp.eq.s32.totalorder %s19, 0
      %p88 = por %p86, %p87
      %p89 = scmp.le.s32.totalorder 1, %s13
      %p90 = scmp.lt.s32.totalorder %s13, 3
      %p91 = pnand %p89, %p90
      %p92 = pneg %p91
      // Predicated region
      $region9: #{tpu_custom_call.1} parent=5 // pred_check
        _
      $region10: #{tpu_custom_call.1} parent=5 // pred_check_branch
        %94 = sbr.rel (%p91) target = $region12
      $region11: #{tpu_custom_call.1} parent=5 // pred_region
        %s95 = ssub.s32 %s13, 1
      $region12: #{tpu_custom_call.1} parent=5 // pred_fallthru
        _
      %p96 = scmp.lt.s32.totalorder %s13, 2
      // Predicated region
      $region13: #{tpu_custom_call.1} parent=5 // pred_check
        %p97 = pneg %p96
      $region14: #{tpu_custom_call.1} parent=5 // pred_check_branch
        %99 = sbr.rel (%p97) target = $region16
      $region15: #{tpu_custom_call.1} parent=5 // pred_region
        // Predicated region
        $region17: #{tpu_custom_call.1} parent=15 // pred_check
          %p100 = pneg %p47
        $region18: #{tpu_custom_call.1} parent=15 // pred_check_branch
          %102 = sbr.rel (%p100) target = $region20
        $region19: #{tpu_custom_call.1} parent=15 // pred_region
          %s103 = sand.u32 %s37, 1
          %s104 = scalar_lea.sflag [#allocation3], %s103
          %s105 = sand.u32 %s37, 1
          %s106 = smul.addr %s105, 8
          %s107 = scalar_lea.vmem [#allocation2], %s106
          %s109 = ssub.s32 128, 128
          %110 = vsyncadd %s104, %s109
          %s111 = sadd.s32 %s21, %s20
          %s112 = smul.addr %s111, 128
          %s113 = scalar_lea.hbm %s0, %s112
          %s115 = sshll.u32 %s107, 4
          %s116 = int_to_ptr.vmem [resolvable:$true] %s115
          %118 = dma.hbm_to_vmem [thread:$0]  %s113, 128, %s116, %s104
        $region20: #{tpu_custom_call.1} parent=15 // pred_fallthru
          _
      $region16: #{tpu_custom_call.1} parent=5 // pred_fallthru
        _
      %p119 = scmp.le.s32.totalorder 1, %s13
      %p120 = scmp.lt.s32.totalorder %s13, 3
      %p121 = pnand %p119, %p120
      %p122 = pneg %p121
      // Predicated region
      $region21: #{tpu_custom_call.1} parent=5 // pred_check
        _
      $region22: #{tpu_custom_call.1} parent=5 // pred_check_branch
        %124 = sbr.rel (%p121) target = $region24
      $region23: #{tpu_custom_call.1} parent=5 // pred_region
        %s125 = ssub.s32 %s13, 1
        %s126 = sand.u32 %s40, 1
        %s127 = scalar_lea.sflag [#allocation3], %s126
        %s128 = sand.u32 %s40, 1
        %s129 = smul.addr %s128, 8
        %s130 = scalar_lea.vmem [#allocation2], %s129
        // Predicated region
        $region25: #{tpu_custom_call.1} parent=23 // pred_check
          %p131 = pneg %p53
        $region26: #{tpu_custom_call.1} parent=23 // pred_check_branch
          %133 = sbr.rel (%p131) target = $region28
        $region27: #{tpu_custom_call.1} parent=23 // pred_region
          %134 = dma.done %s127, 128
        $region28: #{tpu_custom_call.1} parent=23 // pred_fallthru
          _
        %s135 = sand.u32 %s40, 1
        %s136 = scalar_lea.sflag [#allocation3], %s135
        %s137 = sand.u32 %s40, 1
        %s138 = smul.addr %s137, 8
        %s139 = scalar_lea.vmem [#allocation2], %s138
        %p140 = pneg %p53
        %p141 = pneg %p50
        %p142 = pneg %p81
        %p143 = pneg %p78
        %s144 = sand.u32 %s68, 1
        %s145 = scalar_lea.sflag [#allocation4], %s144
        %s146 = sand.u32 %s68, 1
        %s147 = smul.addr %s146, 32
        %s148 = scalar_lea.vmem [#allocation5], %s147
        %v149 = vld [vmem:[%s130] sm:$0xff]
        %v150 = vmul.f32 %v149, 201.06194
        %v151 = vand.u32 2147483647, %v150
        %vm152 = vcmp.le.f32.partialorder %v151, 0.7853982
        %vm153 = vcmp.lt.s32.totalorder %v150, 0
        %v154 = vand.u32 %v150, 2139095040
        %v155 = vshrl.u32 %v154, 23
        %v156 = vsub.s32 %v155, 127
        %v157 = vand.u32 2147483647, %v150
        %v158 = vand.u32 %v157, 8388607
        %v159 = vor.u32 %v158, 8388608
        %v160 = vsub.s32 0, %v159
        %v161 = vadd.s32 %v156, 1
        %vm162 = vcmp.gt.s32.totalorder %v161, 0
        %v163 = vsel %vm162, %v161, 0
        %v164 = vshrl.u32 %v163, 5
        %v165 = vand.u32 %v163, 31
        %v166 = vsub.s32 32, %v165
        %v167 = vshrl.u32 683565275, %v166
        %v168 = vshll.u32 683565275, %v165
        %v169 = vshrl.u32 2475754826, %v166
        %v170 = vor.u32 %v168, %v169
        %v171 = vshll.u32 2475754826, %v165
        %v172 = vshrl.u32 2131351028, %v166
        %v173 = vor.u32 %v171, %v172
        %v174 = vshll.u32 2131351028, %v165
        %v175 = vshrl.u32 2102212464, %v166
        %v176 = vor.u32 %v174, %v175
        %v177 = vshll.u32 2102212464, %v165
        %v178 = vshrl.u32 920167782, %v166
        %v179 = vor.u32 %v177, %v178
        %v180 = vshll.u32 920167782, %v165
        %v181 = vshrl.u32 1326507024, %v166
        %v182 = vor.u32 %v180, %v181
        %vm183 = vcmp.lt.s32.totalorder %v164, 1
        %vm184 = vcmp.lt.s32.totalorder %v164, 2
        %vm185 = vcmp.lt.s32.totalorder %v164, 3
        %vm186 = vcmp.lt.s32.totalorder %v164, 4
        %v187 = vsel %vm183, %v167, %v170
        %v188 = vsel %vm186, %v176, 2102212464
        %v189 = vsel %vm185, %v173, %v188
        %v190 = vsel %vm184, %v187, %v189
        %v191 = vsel %vm183, %v170, %v173
        %v192 = vsel %vm186, %v179, 920167782
        %v193 = vsel %vm185, %v176, %v192
        %v194 = vsel %vm184, %v191, %v193
        %v195 = vsel %vm183, %v173, %v176
        %v196 = vsel %vm186, %v182, 1326507024
        %v197 = vsel %vm185, %v179, %v196
        %v198 = vsel %vm184, %v195, %v197
        %v199 = vshll.u32 %v159, 8
        %v200 = vmul.u32.u64.compose %v199, %v198
        %v201 = vextract.low.u32 %v200
        %v202 = vextract.high.u32 %v200
        %v203 = vmul.u32.u64.compose %v199, %v194
        %v204 = vextract.low.u32 %v203
        %v205 = vextract.high.u32 %v203
        %v206 = vmul.u32 %v199, %v190
        %v207 = vadd.s32 %v202, %v204
        %vm208 = vc.u32 %v202, %v204
        %v209 = vadd.s32 %v205, 1
        %v210 = vsel %vm208, %v209, %v205
        %v211 = vadd.s32 %v206, %v210
        %v212 = vadd.s32 %v211, 536870912
        %v213 = vshrl.u32 %v212, 30
        %v214 = vshll.u32 %v213, 30
        %v215 = vsub.s32 %v211, %v214
        %vm216 = vcmp.lt.s32.totalorder %v215, 0
        %v217 = vsub.s32 0, %v215
        %v218 = vsel %vm216, %v217, %v215
        %v219 = vclz %v218
        %v220 = vsub.s32 %v219, 2
        %vm221 = vcmp.gt.s32.totalorder 0, %v220
        %v222 = vsel %vm221, 0, %v220
        %v223 = vsub.s32 32, %v222
        %v224 = vshll.u32 %v215, %v222
        %v225 = vshrl.u32 %v207, %v223
        %v226 = vor.u32 %v224, %v225
        %v227 = vsub.s32 4294967266, %v222
        %v228 = vadd.s32 %v227, 127
        %v229 = vshll.u32 %v228, 23
        %v230 = vor.u32 4788187, %v229
        %v231 = vand.u32 2147483647, %v230
        %v233 = vcvt.s32.f32 %v226
        %v234 = vmul.f32 %v233, %v231
        %v235 = vxor.u32 %v234, 2147483648
        %v236 = vsel %vm153, %v235, %v234
        %v237 = vsub.s32 4, %v213
        %v238 = vsel %vm153, %v237, %v213
        %v239 = vsel %vm152, %v150, %v236
        %v240 = vsel %vm152, 0, %v238
        %v241 = vcosq.f32.pop %v239
        %v242 = vsinq.f32.pop %v239
        %vm243 = vweird.f32 %v150
        %v244 = vadd.s32 %v240, 3
        %v245 = vand.u32 %v244, 3
        %vm246 = vcmp.lt.s32.totalorder %v245, 2
        %vm247 = vcmp.eq.s32.totalorder %v245, 0
        %v248 = vxor.u32 %v242, 2147483648
        %v249 = vsel %vm247, %v241, %v248
        %vm250 = vcmp.eq.s32.totalorder %v245, 2
        %v251 = vxor.u32 %v241, 2147483648
        %v252 = vsel %vm250, %v251, %v242
        %v253 = vsel %vm246, %v249, %v252
        %v254 = vsel %vm243, nan, %v253
        %v255 = vand.u32 2147483647, %v150
        %vm256 = vcmp.le.f32.partialorder %v255, 0.7853982
        %vm257 = vcmp.lt.s32.totalorder %v150, 0
        %v258 = vand.u32 %v150, 2139095040
        %v259 = vshrl.u32 %v258, 23
        %v260 = vsub.s32 %v259, 127
        %v261 = vand.u32 2147483647, %v150
        %v262 = vand.u32 %v261, 8388607
        %v263 = vor.u32 %v262, 8388608
        %v264 = vsub.s32 0, %v263
        %v265 = vadd.s32 %v260, 1
        %vm266 = vcmp.gt.s32.totalorder %v265, 0
        %v267 = vsel %vm266, %v265, 0
        %v268 = vshrl.u32 %v267, 5
        %v269 = vand.u32 %v267, 31
        %v270 = vsub.s32 32, %v269
        %v271 = vshrl.u32 683565275, %v270
        %v272 = vshll.u32 683565275, %v269
        %v273 = vshrl.u32 2475754826, %v270
        %v274 = vor.u32 %v272, %v273
        %v275 = vshll.u32 2475754826, %v269
        %v276 = vshrl.u32 2131351028, %v270
        %v277 = vor.u32 %v275, %v276
        %v278 = vshll.u32 2131351028, %v269
        %v279 = vshrl.u32 2102212464, %v270
        %v280 = vor.u32 %v278, %v279
        %v281 = vshll.u32 2102212464, %v269
        %v282 = vshrl.u32 920167782, %v270
        %v283 = vor.u32 %v281, %v282
        %v284 = vshll.u32 920167782, %v269
        %v285 = vshrl.u32 1326507024, %v270
        %v286 = vor.u32 %v284, %v285
        %vm287 = vcmp.lt.s32.totalorder %v268, 1
        %vm288 = vcmp.lt.s32.totalorder %v268, 2
        %vm289 = vcmp.lt.s32.totalorder %v268, 3
        %vm290 = vcmp.lt.s32.totalorder %v268, 4
        %v291 = vsel %vm287, %v271, %v274
        %v292 = vsel %vm290, %v280, 2102212464
        %v293 = vsel %vm289, %v277, %v292
        %v294 = vsel %vm288, %v291, %v293
        %v295 = vsel %vm287, %v274, %v277
        %v296 = vsel %vm290, %v283, 920167782
        %v297 = vsel %vm289, %v280, %v296
        %v298 = vsel %vm288, %v295, %v297
        %v299 = vsel %vm287, %v277, %v280
        %v300 = vsel %vm290, %v286, 1326507024
        %v301 = vsel %vm289, %v283, %v300
        %v302 = vsel %vm288, %v299, %v301
        %v303 = vshll.u32 %v263, 8
        %v304 = vmul.u32.u64.compose %v303, %v302
        %v305 = vextract.low.u32 %v304
        %v306 = vextract.high.u32 %v304
        %v307 = vmul.u32.u64.compose %v303, %v298
        %v308 = vextract.low.u32 %v307
        %v309 = vextract.high.u32 %v307
        %v310 = vmul.u32 %v303, %v294
        %v311 = vadd.s32 %v306, %v308
        %vm312 = vc.u32 %v306, %v308
        %v313 = vadd.s32 %v309, 1
        %v314 = vsel %vm312, %v313, %v309
        %v315 = vadd.s32 %v310, %v314
        %v316 = vadd.s32 %v315, 536870912
        %v317 = vshrl.u32 %v316, 30
        %v318 = vshll.u32 %v317, 30
        %v319 = vsub.s32 %v315, %v318
        %vm320 = vcmp.lt.s32.totalorder %v319, 0
        %v321 = vsub.s32 0, %v319
        %v322 = vsel %vm320, %v321, %v319
        %v323 = vclz %v322
        %v324 = vsub.s32 %v323, 2
        %vm325 = vcmp.gt.s32.totalorder 0, %v324
        %v326 = vsel %vm325, 0, %v324
        %v327 = vsub.s32 32, %v326
        %v328 = vshll.u32 %v319, %v326
        %v329 = vshrl.u32 %v311, %v327
        %v330 = vor.u32 %v328, %v329
        %v331 = vsub.s32 4294967266, %v326
        %v332 = vadd.s32 %v331, 127
        %v333 = vshll.u32 %v332, 23
        %v334 = vor.u32 4788187, %v333
        %v335 = vand.u32 2147483647, %v334
        %v337 = vcvt.s32.f32 %v330
        %v338 = vmul.f32 %v337, %v335
        %v339 = vxor.u32 %v338, 2147483648
        %v340 = vsel %vm257, %v339, %v338
        %v341 = vsub.s32 4, %v317
        %v342 = vsel %vm257, %v341, %v317
        %v343 = vsel %vm256, %v150, %v340
        %v344 = vsel %vm256, 0, %v342
        %v345 = vcosq.f32.pop %v343
        %v346 = vsinq.f32.pop %v343
        %vm347 = vweird.f32 %v150
        %v348 = vand.u32 %v344, 3
        %vm349 = vcmp.lt.s32.totalorder %v348, 2
        %vm350 = vcmp.eq.s32.totalorder %v348, 0
        %v351 = vxor.u32 %v346, 2147483648
        %v352 = vsel %vm350, %v345, %v351
        %vm353 = vcmp.eq.s32.totalorder %v348, 2
        %v354 = vxor.u32 %v345, 2147483648
        %v355 = vsel %vm353, %v354, %v346
        %v356 = vsel %vm349, %v352, %v355
        %v357 = vsel %vm347, nan, %v356
        %358 = vst [vmem:[%s148] sm:$0xff] %v254
        %s359 = scalar_lea.vmem %s148, 16 [#allocation5]
        %360 = vst [vmem:[%s359] sm:$0xff] %v357
        %v361 = vmul.f32 %v254, 2.0
        %v362 = vmul.f32 %v361, %v357
        %v363 = vmul.f32 %v361, %v254
        %v364 = vsub.f32 1.0, %v363
        %s365 = scalar_lea.vmem %s148, 8 [#allocation5]
        %366 = vst [vmem:[%s365] sm:$0xff] %v362
        %s367 = scalar_lea.vmem %s148, 24 [#allocation5]
        %368 = vst [vmem:[%s367] sm:$0xff] %v364
        %s369 = sand.u32 %s68, 1
        %s370 = scalar_lea.sflag [#allocation4], %s369
        %s371 = sand.u32 %s68, 1
        %s372 = smul.addr %s371, 32
        %s373 = scalar_lea.vmem [#allocation5], %s372
        // Predicated region
        $region29: #{tpu_custom_call.1} parent=23 // pred_check
          %p374 = pneg %p78
        $region30: #{tpu_custom_call.1} parent=23 // pred_check_branch
          %376 = sbr.rel (%p374) target = $region32
        $region31: #{tpu_custom_call.1} parent=23 // pred_region
          %s378 = ssub.s32 512, 512
          %379 = vsyncadd %s370, %s378
          %s380 = smul.addr %s22, 4
          %s381 = sadd.s32 %s23, %s380
          %s382 = smul.addr %s381, 128
          %s383 = scalar_lea.hbm %s1, %s382
          %s384 = sshll.u32 %s373, 4
          %s385 = int_to_ptr.vmem [resolvable:$true] %s384
          %390 = dma.vmem_to_hbm [thread:$0]  %s385, 512, %s383, %s370, 128, 128, 8
        $region32: #{tpu_custom_call.1} parent=23 // pred_fallthru
          _
      $region24: #{tpu_custom_call.1} parent=5 // pred_fallthru
        _
      %p391 = scmp.le.s32.totalorder 2, %s13
      // Predicated region
      $region33: #{tpu_custom_call.1} parent=5 // pred_check
        %p392 = pneg %p391
      $region34: #{tpu_custom_call.1} parent=5 // pred_check_branch
        %394 = sbr.rel (%p392) target = $region36
      $region35: #{tpu_custom_call.1} parent=5 // pred_region
        %s395 = ssub.s32 %s13, 2
        // Predicated region
        $region37: #{tpu_custom_call.1} parent=35 // pred_check
          %p396 = pneg %p84
        $region38: #{tpu_custom_call.1} parent=35 // pred_check_branch
          %398 = sbr.rel (%p396) target = $region40
        $region39: #{tpu_custom_call.1} parent=35 // pred_region
          %s399 = sand.u32 %s69, 1
          %s400 = scalar_lea.sflag [#allocation4], %s399
          %s401 = sand.u32 %s69, 1
          %s402 = smul.addr %s401, 32
          %s403 = scalar_lea.vmem [#allocation5], %s402
          %404 = dma.done %s400, 512
        $region40: #{tpu_custom_call.1} parent=35 // pred_fallthru
          _
      $region36: #{tpu_custom_call.1} parent=5 // pred_fallthru
        _
    $region6: #{tpu_custom_call.1} parent=1 // loop_footer
      %s17 = sadd.s32 1, %s13
    $region7: #{tpu_custom_call.1} parent=1 // loop_footer_branch
      %12 = sbr.rel target = $region3
    $region8: #{tpu_custom_call.1} parent=1 // loop_exit
      _
    %405 = vsyncpa [#allocation3], 1
    %s406 = scalar_lea.sflag [#allocation3], 1
    %407 = vsyncpa %s406, 1
    %408 = vsyncpa [#allocation4], 1
    %s409 = scalar_lea.sflag [#allocation4], 1
    %410 = vsyncpa %s409, 1

</llo_original>
